<compile_context>
chip_gen: v7x
topology: tpu7x:2x2x1
jax: 0.10.0
libtpu: 0.0.40
codegen_flags: <defaults>
</compile_context>

<pallas_src>
import jax
import jax.numpy as jnp
from jax.experimental import pallas as pl
from jax.experimental.pallas import tpu as pltpu

LANE = 128
MAX_TILE_B = 2048  # rows per grid step; ~a few MiB of VMEM at f32, well in-budget


def _round_up(x, m):
    return (x + m - 1) // m * m


def _min_sublane(dtype):
    # (8,128) min tile is for 32-bit; packed dtypes need 16 / 32 sublanes.
    return {4: 8, 2: 16, 1: 32}[jnp.dtype(dtype).itemsize]


def _make_qnet_kernel(num_blocks, compute_dtype):
    """Kernel: fused embedding + `num_blocks` (Linear+ReLU) + final Linear."""

    def kernel(*refs):
        # refs = [state, action, Ws_pad, Wa_pad, bemb,
        #         W0, b0, ..., W_{n-1}, b_{n-1}, wl_row, bl, out]
        s_ref, a_ref, ws_ref, wa_ref, bemb_ref = refs[:5]
        block_refs = refs[5:-3]
        wl_ref, bl_ref = refs[-3], refs[-2]
        out_ref = refs[-1]
        cd = compute_dtype

        # Fused embedding: two small matmuls into disjoint column halves of the
        # padded hidden width reproduce the concat with no XLU work.  No
        # activation here, matching the PyTorch forward().  Accumulate in f32.
        h = (
            jnp.dot(s_ref[...].astype(cd), ws_ref[...],
                    preferred_element_type=jnp.float32)
            + jnp.dot(a_ref[...].astype(cd), wa_ref[...],
                      preferred_element_type=jnp.float32)
            + bemb_ref[...]
        )

        # Hidden blocks: Linear + ReLU.  Matmul operands in compute_dtype
        # (bf16 by default), f32 accumulation, f32 bias/ReLU.
        for i in range(num_blocks):
            w_ref = block_refs[2 * i]
            b_ref = block_refs[2 * i + 1]
            h = (
                jnp.dot(h.astype(cd), w_ref[...],
                        preferred_element_type=jnp.float32)
                + b_ref[...]
            )
            h = jnp.maximum(h, 0.0)

        # Final Linear (output width 1): VPU multiply + lane reduction in f32
        # instead of a 128-wide MXU matmul that would be 127/128 padding.
        v = jnp.sum(h * wl_ref[...], axis=-1, keepdims=True) + bl_ref[...]
        out_ref[...] = v.astype(out_ref.dtype)

    return kernel


def init_qnet_params(key, state_size, action_size, hidden_layers,
                     dtype=jnp.float32):
    """Deterministic PyTorch-Linear-style init: U(-1/sqrt(fan_in), 1/sqrt(fan_in))."""
    params = {}

    def linear(key, fan_in, fan_out):
        kw, kb = jax.random.split(key)
        bound = 1.0 / jnp.sqrt(jnp.asarray(fan_in, jnp.float32))
        w = jax.random.uniform(kw, (fan_in, fan_out), dtype, -bound, bound)
        b = jax.random.uniform(kb, (1, fan_out), dtype, -bound, bound)
        return w, b

    keys = jax.random.split(key, 3 + len(hidden_layers))
    half = hidden_layers[0] // 2
    params["Ws"], params["bs"] = linear(keys[0], state_size, half)
    params["Wa"], params["ba"] = linear(keys[1], action_size, half)

    in_ch = hidden_layers[0]
    params["blocks"] = []
    for idx, h in enumerate(hidden_layers):
        w, b = linear(keys[2 + idx], in_ch, h)
        params["blocks"].append((w, b))
        in_ch = h
    params["Wl"], params["bl"] = linear(keys[-1], in_ch, 1)
    return params


def _pack_padded_params(params, compute_dtype):
    """Builds lane-dense, 128-column-padded weights.

    Returns (Ws_pad, Wa_pad, bemb, [(Wi, bi), ...], wl_row, bl) where:
      * Ws_pad (state_size, h0_p) holds Ws in columns [:half], zeros elsewhere,
      * Wa_pad (action_size, h0_p) holds Wa in columns [half:h0], zeros elsewhere
        (so Ws_pad/Wa_pad matmuls sum to the concat of the two embeddings),
      * every hidden weight is zero-padded to 128-multiples (compute_dtype),
      * biases stay float32,
      * the final layer is a float32 row vector wl_row (1, in_p) + scalar bl.
    Zero padding guarantees padded lanes stay exactly zero through bias, ReLU
    and the final reduction, so they never leak into the real output.
    """
    Ws, bs = params["Ws"], params["bs"]
    Wa, ba = params["Wa"], params["ba"]
    state_size = Ws.shape[0]
    action_size = Wa.shape[0]
    half = Ws.shape[1]
    h0 = 2 * half
    h0_p = _round_up(h0, LANE)

    ws_p = jnp.zeros((state_size, h0_p), compute_dtype)
    ws_p = ws_p.at[:, :half].set(Ws.astype(compute_dtype))
    wa_p = jnp.zeros((action_size, h0_p), compute_dtype)
    wa_p = wa_p.at[:, half:h0].set(Wa.astype(compute_dtype))
    bemb = jnp.zeros((1, h0_p), jnp.float32)
    bemb = bemb.at[:, :half].set(bs.astype(jnp.float32))
    bemb = bemb.at[:, half:h0].set(ba.astype(jnp.float32))

    blocks_p = []
    in_p, in_real = h0_p, h0
    for w, b in params["blocks"]:
        out_real = w.shape[1]
        out_p = _round_up(out_real, LANE)
        wp = jnp.zeros((in_p, out_p), compute_dtype)
        wp = wp.at[:in_real, :out_real].set(w.astype(compute_dtype))
        bp = jnp.zeros((1, out_p), jnp.float32)
        bp = bp.at[:, :out_real].set(b.astype(jnp.float32))
        blocks_p.append((wp, bp))
        in_p, in_real = out_p, out_real

    Wl, bl = params["Wl"], params["bl"]  # (in_real, 1), (1, 1)
    wl_row = jnp.zeros((1, in_p), jnp.float32)
    wl_row = wl_row.at[:, :in_real].set(Wl[:, 0].astype(jnp.float32)[None, :])
    bl_s = bl.astype(jnp.float32).reshape(1, 1)
    return ws_p, wa_p, bemb, blocks_p, wl_row, bl_s


def qnet_forward_pallas(state, action, params, *,
                        compute_dtype=jnp.bfloat16, max_tile_b=MAX_TILE_B):
    B, state_size = state.shape
    action_size = action.shape[1]
    out_dtype = state.dtype
    num_blocks = len(params["blocks"])

    ws_p, wa_p, bemb, blocks_p, wl_row, bl = _pack_padded_params(
        params, compute_dtype)

    # Balanced batch tiles; >=2 grid steps whenever the batch can be split so
    # the "parallel" axis shards across both v7x TensorCores (no-op v5e/v6e).
    sub = max(_min_sublane(state.dtype), _min_sublane(action.dtype),
              _min_sublane(out_dtype))
    n_tiles = max(1, -(-B // max_tile_b))
    if n_tiles == 1 and B >= 2 * sub:
        n_tiles = 2
    tb = _round_up(-(-B // n_tiles), sub)
    b_pad = tb * n_tiles

    # Only batch-pad; no lane padding and no concat copy of the inputs.
    state_p = jnp.pad(state, ((0, b_pad - B), (0, 0)))
    action_p = jnp.pad(action, ((0, b_pad - B), (0, 0)))

    flat_inputs = [state_p, action_p, ws_p, wa_p, bemb]
    for w, b in blocks_p:
        flat_inputs.extend([w, b])
    flat_inputs.extend([wl_row, bl])

    # Batch-tiled state/action (block last dim == full dim, so legal at the
    # real widths); every weight/bias uses a constant index_map so it is
    # DMA'd once and stays VMEM-resident across all grid steps.
    in_specs = [
        pl.BlockSpec((tb, state_size), lambda i: (i, 0)),
        pl.BlockSpec((tb, action_size), lambda i: (i, 0)),
    ]
    for t in flat_inputs[2:]:
        in_specs.append(pl.BlockSpec(t.shape, lambda i: (0, 0)))
    out_specs = pl.BlockSpec((tb, 1), lambda i: (i, 0))

    # Cost hint for the XLA scheduler (updated for the slim I/O footprint).
    flops = 2 * b_pad * (state_size + action_size) * ws_p.shape[1]
    for w, _ in blocks_p:
        flops += 2 * b_pad * w.shape[0] * w.shape[1]
    flops += 2 * b_pad * wl_row.shape[1]
    bytes_accessed = b_pad * jnp.dtype(out_dtype).itemsize
    for t in flat_inputs:
        bytes_accessed += t.size * jnp.dtype(t.dtype).itemsize

    out = pl.pallas_call(
        _make_qnet_kernel(num_blocks, compute_dtype),
        out_shape=jax.ShapeDtypeStruct((b_pad, 1), out_dtype),
        grid=(n_tiles,),
        in_specs=in_specs,
        out_specs=out_specs,
        compiler_params=pltpu.CompilerParams(
            dimension_semantics=("parallel",)),
        cost_estimate=pl.CostEstimate(
            flops=int(flops), transcendentals=0,
            bytes_accessed=int(bytes_accessed)),
    )(*flat_inputs)

    # Drop padded batch rows; output width is already exactly 1.
    return out[:B]


def qnet_forward_ref(state, action, params):
    """Pure-JAX reference mirroring the PyTorch module (normalize=False)."""
    s_emb = state @ params["Ws"] + params["bs"]
    a_emb = action @ params["Wa"] + params["ba"]
    h = jnp.concatenate([s_emb, a_emb], axis=-1)
    for w, b in params["blocks"]:
        h = jnp.maximum(h @ w + b, 0.0)
    return h @ params["Wl"] + params["bl"]


if __name__ == "__main__":
    # Small shapes consistent with the module's forward.
    batch = 2
    state_size = 16
    action_size = 8
    hidden_layers = [32, 32]

    key = jax.random.PRNGKey(0)
    k_state, k_action, k_params = jax.random.split(key, 3)

    state = jax.random.normal(k_state, (batch, state_size), jnp.float32)
    action = jax.random.normal(k_action, (batch, action_size), jnp.float32)
    params = init_qnet_params(k_params, state_size, action_size, hidden_layers)

    v_ref = qnet_forward_ref(state, action, params)

    # f32 compute path: matches the reference tightly.
    v_f32 = jax.block_until_ready(
        qnet_forward_pallas(state, action, params, compute_dtype=jnp.float32))
    assert v_f32.shape == (batch, 1), v_f32.shape
    assert jnp.allclose(v_f32, v_ref, atol=1e-4, rtol=1e-4), (v_f32, v_ref)

    # Default bf16-matmul path (MXU-native rate): looser tolerance.
    v_bf16 = jax.block_until_ready(qnet_forward_pallas(state, action, params))
    assert v_bf16.shape == (batch, 1), v_bf16.shape
    assert jnp.allclose(v_bf16, v_ref, atol=1e-1, rtol=1e-1), (v_bf16, v_ref)

    print("KERNEL_OK")
</pallas_src>

<mosaic_0001>
module attributes {stable_mosaic.version = 11 : i64} {
  func.func @kernel(%arg0: i32, %arg1: memref<8x16xf32, #tpu.memory_space<vmem>>, %arg2: memref<8x8xf32, #tpu.memory_space<vmem>>, %arg3: memref<16x128xf32, #tpu.memory_space<vmem>>, %arg4: memref<8x128xf32, #tpu.memory_space<vmem>>, %arg5: memref<1x128xf32, #tpu.memory_space<vmem>>, %arg6: memref<128x128xf32, #tpu.memory_space<vmem>>, %arg7: memref<1x128xf32, #tpu.memory_space<vmem>>, %arg8: memref<128x128xf32, #tpu.memory_space<vmem>>, %arg9: memref<1x128xf32, #tpu.memory_space<vmem>>, %arg10: memref<1x128xf32, #tpu.memory_space<vmem>>, %arg11: memref<1x1xf32, #tpu.memory_space<vmem>>, %arg12: memref<8x1xf32, #tpu.memory_space<vmem>>) attributes {dimension_semantics = [#tpu.dimension_semantics<parallel>], iteration_bounds = array<i64: 1>, scalar_prefetch = 0 : i64, scratch_operands = 0 : i64, tpu.core_type = #tpu.core_type<tc>, window_params = [{transform_indices = @transform_0, window_bounds = array<i64: 8, 16>}, {transform_indices = @transform_1, window_bounds = array<i64: 8, 8>}, {pipeline_mode = #tpu.pipeline_mode<synchronous>, transform_indices = @transform_2, window_bounds = array<i64: 16, 128>}, {pipeline_mode = #tpu.pipeline_mode<synchronous>, transform_indices = @transform_3, window_bounds = array<i64: 8, 128>}, {pipeline_mode = #tpu.pipeline_mode<synchronous>, transform_indices = @transform_4, window_bounds = array<i64: 1, 128>}, {pipeline_mode = #tpu.pipeline_mode<synchronous>, transform_indices = @transform_5, window_bounds = array<i64: 128, 128>}, {pipeline_mode = #tpu.pipeline_mode<synchronous>, transform_indices = @transform_6, window_bounds = array<i64: 1, 128>}, {pipeline_mode = #tpu.pipeline_mode<synchronous>, transform_indices = @transform_7, window_bounds = array<i64: 128, 128>}, {pipeline_mode = #tpu.pipeline_mode<synchronous>, transform_indices = @transform_8, window_bounds = array<i64: 1, 128>}, {pipeline_mode = #tpu.pipeline_mode<synchronous>, transform_indices = @transform_9, window_bounds = array<i64: 1, 128>}, {pipeline_mode = #tpu.pipeline_mode<synchronous>, transform_indices = @transform_10, window_bounds = array<i64: 1, 1>}, {transform_indices = @transform_11, window_bounds = array<i64: 8, 1>}]} {
    %c0 = arith.constant 0 : index
    %c0_0 = arith.constant 0 : index
    %0 = vector.load %arg1[%c0, %c0_0] : memref<8x16xf32, #tpu.memory_space<vmem>>, vector<8x16xf32>
    %c0_1 = arith.constant 0 : index
    %c0_2 = arith.constant 0 : index
    %1 = vector.load %arg3[%c0_1, %c0_2] : memref<16x128xf32, #tpu.memory_space<vmem>>, vector<16x128xf32>
    %cst = arith.constant dense<0.000000e+00> : vector<8x128xf32>
    %2 = tpu.matmul %0, %1, %cst {dimension_numbers = #tpu.dot_dimension_numbers<[1], [0], [0], [1], [0, 0, 1, 1], [], []>} : vector<8x16xf32>, vector<16x128xf32>, vector<8x128xf32> -> vector<8x128xf32>
    %c0_3 = arith.constant 0 : index
    %c0_4 = arith.constant 0 : index
    %3 = vector.load %arg2[%c0_3, %c0_4] : memref<8x8xf32, #tpu.memory_space<vmem>>, vector<8x8xf32>
    %c0_5 = arith.constant 0 : index
    %c0_6 = arith.constant 0 : index
    %4 = vector.load %arg4[%c0_5, %c0_6] : memref<8x128xf32, #tpu.memory_space<vmem>>, vector<8x128xf32>
    %cst_7 = arith.constant dense<0.000000e+00> : vector<8x128xf32>
    %5 = tpu.matmul %3, %4, %cst_7 {dimension_numbers = #tpu.dot_dimension_numbers<[1], [0], [0], [1], [0, 0, 1, 1], [], []>} : vector<8x8xf32>, vector<8x128xf32>, vector<8x128xf32> -> vector<8x128xf32>
    %6 = arith.addf %2, %5 : vector<8x128xf32>
    %c0_8 = arith.constant 0 : index
    %c0_9 = arith.constant 0 : index
    %7 = vector.load %arg5[%c0_8, %c0_9] : memref<1x128xf32, #tpu.memory_space<vmem>>, vector<1x128xf32>
    %8 = vector.broadcast %7 : vector<1x128xf32> to vector<8x128xf32>
    %9 = arith.addf %6, %8 : vector<8x128xf32>
    %c0_10 = arith.constant 0 : index
    %c0_11 = arith.constant 0 : index
    %10 = vector.load %arg6[%c0_10, %c0_11] : memref<128x128xf32, #tpu.memory_space<vmem>>, vector<128x128xf32>
    %cst_12 = arith.constant dense<0.000000e+00> : vector<8x128xf32>
    %11 = tpu.matmul %9, %10, %cst_12 {dimension_numbers = #tpu.dot_dimension_numbers<[1], [0], [0], [1], [0, 0, 1, 1], [], []>} : vector<8x128xf32>, vector<128x128xf32>, vector<8x128xf32> -> vector<8x128xf32>
    %c0_13 = arith.constant 0 : index
    %c0_14 = arith.constant 0 : index
    %12 = vector.load %arg7[%c0_13, %c0_14] : memref<1x128xf32, #tpu.memory_space<vmem>>, vector<1x128xf32>
    %13 = vector.broadcast %12 : vector<1x128xf32> to vector<8x128xf32>
    %14 = arith.addf %11, %13 : vector<8x128xf32>
    %cst_15 = arith.constant 0.000000e+00 : f32
    %15 = vector.broadcast %cst_15 : f32 to vector<8x128xf32>
    %16 = arith.maximumf %14, %15 : vector<8x128xf32>
    %c0_16 = arith.constant 0 : index
    %c0_17 = arith.constant 0 : index
    %17 = vector.load %arg8[%c0_16, %c0_17] : memref<128x128xf32, #tpu.memory_space<vmem>>, vector<128x128xf32>
    %cst_18 = arith.constant dense<0.000000e+00> : vector<8x128xf32>
    %18 = tpu.matmul %16, %17, %cst_18 {dimension_numbers = #tpu.dot_dimension_numbers<[1], [0], [0], [1], [0, 0, 1, 1], [], []>} : vector<8x128xf32>, vector<128x128xf32>, vector<8x128xf32> -> vector<8x128xf32>
    %c0_19 = arith.constant 0 : index
    %c0_20 = arith.constant 0 : index
    %19 = vector.load %arg9[%c0_19, %c0_20] : memref<1x128xf32, #tpu.memory_space<vmem>>, vector<1x128xf32>
    %20 = vector.broadcast %19 : vector<1x128xf32> to vector<8x128xf32>
    %21 = arith.addf %18, %20 : vector<8x128xf32>
    %cst_21 = arith.constant 0.000000e+00 : f32
    %22 = vector.broadcast %cst_21 : f32 to vector<8x128xf32>
    %23 = arith.maximumf %21, %22 : vector<8x128xf32>
    %c0_22 = arith.constant 0 : index
    %c0_23 = arith.constant 0 : index
    %24 = vector.load %arg10[%c0_22, %c0_23] : memref<1x128xf32, #tpu.memory_space<vmem>>, vector<1x128xf32>
    %25 = vector.broadcast %24 : vector<1x128xf32> to vector<8x128xf32>
    %26 = arith.mulf %23, %25 : vector<8x128xf32>
    %cst_24 = arith.constant dense<0.000000e+00> : vector<8xf32>
    %27 = vector.multi_reduction <add>, %26, %cst_24 [1] : vector<8x128xf32> to vector<8xf32>
    %28 = vector.shape_cast %27 : vector<8xf32> to vector<8x1xf32>
    %c0_25 = arith.constant 0 : index
    %c0_26 = arith.constant 0 : index
    %29 = vector.load %arg11[%c0_25, %c0_26] : memref<1x1xf32, #tpu.memory_space<vmem>>, vector<1x1xf32>
    %30 = vector.broadcast %29 : vector<1x1xf32> to vector<8x1xf32>
    %31 = arith.addf %28, %30 : vector<8x1xf32>
    %c0_27 = arith.constant 0 : index
    %c0_28 = arith.constant 0 : index
    %32 = vector.load %arg12[%c0_27, %c0_28] : memref<8x1xf32, #tpu.memory_space<vmem>>, vector<8x1xf32>
    tpu.vector_store %arg12[%c0_27, %c0_28], %31 {strides = array<i32>} : memref<8x1xf32, #tpu.memory_space<vmem>>, vector<8x1xf32>,
    return
  }
  func.func @transform_0(%arg0: i32) -> (i32, i32) {
    %c0_i32 = arith.constant 0 : i32
    %c0_i32_0 = arith.constant 0 : i32
    return %arg0, %c0_i32 : i32, i32
  }
  func.func @transform_1(%arg0: i32) -> (i32, i32) {
    %c0_i32 = arith.constant 0 : i32
    %c0_i32_0 = arith.constant 0 : i32
    return %arg0, %c0_i32 : i32, i32
  }
  func.func @transform_2(%arg0: i32) -> (i32, i32) {
    %c0_i32 = arith.constant 0 : i32
    %c0_i32_0 = arith.constant 0 : i32
    %c0_i32_1 = arith.constant 0 : i32
    return %c0_i32, %c0_i32_0 : i32, i32
  }
  func.func @transform_3(%arg0: i32) -> (i32, i32) {
    %c0_i32 = arith.constant 0 : i32
    %c0_i32_0 = arith.constant 0 : i32
    %c0_i32_1 = arith.constant 0 : i32
    return %c0_i32, %c0_i32_0 : i32, i32
  }
  func.func @transform_4(%arg0: i32) -> (i32, i32) {
    %c0_i32 = arith.constant 0 : i32
    %c0_i32_0 = arith.constant 0 : i32
    %c0_i32_1 = arith.constant 0 : i32
    return %c0_i32, %c0_i32_0 : i32, i32
  }
  func.func @transform_5(%arg0: i32) -> (i32, i32) {
    %c0_i32 = arith.constant 0 : i32
    %c0_i32_0 = arith.constant 0 : i32
    %c0_i32_1 = arith.constant 0 : i32
    return %c0_i32, %c0_i32_0 : i32, i32
  }
  func.func @transform_6(%arg0: i32) -> (i32, i32) {
    %c0_i32 = arith.constant 0 : i32
    %c0_i32_0 = arith.constant 0 : i32
    %c0_i32_1 = arith.constant 0 : i32
    return %c0_i32, %c0_i32_0 : i32, i32
  }
  func.func @transform_7(%arg0: i32) -> (i32, i32) {
    %c0_i32 = arith.constant 0 : i32
    %c0_i32_0 = arith.constant 0 : i32
    %c0_i32_1 = arith.constant 0 : i32
    return %c0_i32, %c0_i32_0 : i32, i32
  }
  func.func @transform_8(%arg0: i32) -> (i32, i32) {
    %c0_i32 = arith.constant 0 : i32
    %c0_i32_0 = arith.constant 0 : i32
    %c0_i32_1 = arith.constant 0 : i32
    return %c0_i32, %c0_i32_0 : i32, i32
  }
  func.func @transform_9(%arg0: i32) -> (i32, i32) {
    %c0_i32 = arith.constant 0 : i32
    %c0_i32_0 = arith.constant 0 : i32
    %c0_i32_1 = arith.constant 0 : i32
    return %c0_i32, %c0_i32_0 : i32, i32
  }
  func.func @transform_10(%arg0: i32) -> (i32, i32) {
    %c0_i32 = arith.constant 0 : i32
    %c0_i32_0 = arith.constant 0 : i32
    %c0_i32_1 = arith.constant 0 : i32
    return %c0_i32, %c0_i32_0 : i32, i32
  }
  func.func @transform_11(%arg0: i32) -> (i32, i32) {
    %c0_i32 = arith.constant 0 : i32
    %c0_i32_0 = arith.constant 0 : i32
    return %arg0, %c0_i32 : i32, i32
  }
}

</mosaic_0001>

<llo_original>
// kernel: tpu_custom_call.1
$region0: #{tpu_custom_call.1}
  #allocation0 [shape = 'u32[]', space=smem, size = 0x4, offset = 0x4, fixed_abs, tag = 'smem constant byte address 0x4 - core index']
  #allocation1 [shape = 'u32[144,128]{1,0:T(1,128)}', space=vmem, size = 0x12000, scoped, tag = 'internal scratch']
  #allocation2 [shape = 'f32[1,1]{1,0:T(1,128)S(1)}', space=vmem, size = 0x200, scoped, tag = 'scoped memory for tpu_custom_call.1']
  %s0 = inlined_call_operand.hbm [shape: f32[8,16], index: 0, kind: input, shape index: {}]
  %s1 = inlined_call_operand.hbm [shape: f32[8,8], index: 1, kind: input, shape index: {}]
  %s2 = inlined_call_operand.hbm [shape: f32[16,128], index: 2, kind: input, shape index: {}]
  %s3 = inlined_call_operand.vmem [shape: f32[8,128], index: 3, kind: input, shape index: {}]
  %s4 = inlined_call_operand.vmem [shape: f32[1,128], index: 4, kind: input, shape index: {}]
  %s5 = inlined_call_operand.hbm [shape: f32[128,128], index: 5, kind: input, shape index: {}]
  %s6 = inlined_call_operand.vmem [shape: f32[1,128], index: 6, kind: input, shape index: {}]
  %s7 = inlined_call_operand.hbm [shape: f32[128,128], index: 7, kind: input, shape index: {}]
  %s8 = inlined_call_operand.vmem [shape: f32[1,128], index: 8, kind: input, shape index: {}]
  %s9 = inlined_call_operand.vmem [shape: f32[1,128], index: 9, kind: input, shape index: {}]
  %s10 = inlined_call_operand.<no memory space> [shape: f32[1,1], index: 10, kind: input, shape index: {}]
  %s11 = inlined_call_operand.vmem [shape: f32[8,1], index: 11, kind: output, shape index: {}]
  %s12 = sld [smem:[#allocation0]]
  $region74: #{tpu_custom_call.1} parent=0
    _
  %s14 = ssub.s32 1, %s12
  %s15 = scalar_select 0, %s14, %s12
  %v16 = vstv %s10
  %17 = vst [vmem:[#allocation2] sm:$0x1] %v16
  $region1: #{tpu_custom_call.1} parent=0
    #allocation3 [shape = 'u8[4096]{0}', space=vmem, size = 0x1000, scoped, tag = 'input window, operand 0, single buffered']
    #allocation4 [shape = 's32[1]{0}', space=sflag, size = 0x4, scoped, tag = 'scoped memory for tpu_custom_call.1']
    #allocation5 [shape = 'u8[4096]{0}', space=vmem, size = 0x1000, scoped, tag = 'input window, operand 1, single buffered']
    #allocation6 [shape = 's32[1]{0}', space=sflag, size = 0x4, scoped, tag = 'scoped memory for tpu_custom_call.1']
    #allocation7 [shape = 'u8[8192]{0}', space=vmem, size = 0x2000, scoped, tag = 'input window, operand 2, single buffered']
    #allocation8 [shape = 'u8[65536]{0}', space=vmem, size = 0x10000, scoped, tag = 'input window, operand 5, single buffered']
    #allocation9 [shape = 's32[1]{0}', space=sflag, size = 0x4, scoped, tag = 'scoped memory for tpu_custom_call.1']
    #allocation10 [shape = 'u8[65536]{0}', space=vmem, size = 0x10000, scoped, tag = 'input window, operand 7, single buffered']
    %18 = vsyncpa [#allocation4], 0
    %19 = vsyncpa [#allocation6], 0
    %20 = vsyncpa [#allocation9], 0
    // Predicated region
    $region2: #{tpu_custom_call.1} parent=1 // pred_check
      _
    $region3: #{tpu_custom_call.1} parent=1 // pred_check_branch
      %22 = sbr.rel (0) target = $region5
    $region4: #{tpu_custom_call.1} parent=1 // pred_region
      %s24 = ssub.s32 128, 128
      %25 = vsyncadd [#allocation4], %s24
      %s27 = sshll.u32 [#allocation3], 4
      %s28 = int_to_ptr.vmem [resolvable:$true] %s27
      %30 = dma.hbm_to_vmem [thread:$0]  %s0, 128, %s28, [#allocation4]
    $region5: #{tpu_custom_call.1} parent=1 // pred_fallthru
      _
    // Predicated region
    $region6: #{tpu_custom_call.1} parent=1 // pred_check
      _
    $region7: #{tpu_custom_call.1} parent=1 // pred_check_branch
      %32 = sbr.rel (0) target = $region9
    $region8: #{tpu_custom_call.1} parent=1 // pred_region
      %s34 = ssub.s32 128, 128
      %35 = vsyncadd [#allocation6], %s34
      %s37 = sshll.u32 [#allocation5], 4
      %s38 = int_to_ptr.vmem [resolvable:$true] %s37
      %40 = dma.hbm_to_vmem [thread:$0]  %s1, 128, %s38, [#allocation6]
    $region9: #{tpu_custom_call.1} parent=1 // pred_fallthru
      _
    // Predicated region
    $region10: #{tpu_custom_call.1} parent=1 // pred_check
      _
    $region11: #{tpu_custom_call.1} parent=1 // pred_check_branch
      %42 = sbr.rel (0) target = $region13
    $region12: #{tpu_custom_call.1} parent=1 // pred_region
      %s44 = ssub.s32 256, 256
      %45 = vsyncadd [#allocation6], %s44
      %s46 = sshll.u32 [#allocation7], 4
      %s47 = int_to_ptr.vmem [resolvable:$true] %s46
      %52 = dma.hbm_to_vmem [thread:$0]  %s2, 256, %s47, [#allocation6], 128, 128, 8
    $region13: #{tpu_custom_call.1} parent=1 // pred_fallthru
      _
    // Predicated region
    $region14: #{tpu_custom_call.1} parent=1 // pred_check
      _
    $region15: #{tpu_custom_call.1} parent=1 // pred_check_branch
      %54 = sbr.rel (0) target = $region17
    $region16: #{tpu_custom_call.1} parent=1 // pred_region
      _
    $region17: #{tpu_custom_call.1} parent=1 // pred_fallthru
      _
    // Predicated region
    $region18: #{tpu_custom_call.1} parent=1 // pred_check
      _
    $region19: #{tpu_custom_call.1} parent=1 // pred_check_branch
      %56 = sbr.rel (0) target = $region21
    $region20: #{tpu_custom_call.1} parent=1 // pred_region
      _
    $region21: #{tpu_custom_call.1} parent=1 // pred_fallthru
      _
    // Predicated region
    $region22: #{tpu_custom_call.1} parent=1 // pred_check
      _
    $region23: #{tpu_custom_call.1} parent=1 // pred_check_branch
      %58 = sbr.rel (0) target = $region25
    $region24: #{tpu_custom_call.1} parent=1 // pred_region
      %s60 = ssub.s32 2048, 2048
      %61 = vsyncadd [#allocation9], %s60
      %s62 = sshll.u32 [#allocation8], 4
      %s63 = int_to_ptr.vmem [resolvable:$true] %s62
      %68 = dma.hbm_to_vmem [thread:$0]  %s5, 2048, %s63, [#allocation9], 128, 128, 8
    $region25: #{tpu_custom_call.1} parent=1 // pred_fallthru
      _
    // Predicated region
    $region26: #{tpu_custom_call.1} parent=1 // pred_check
      _
    $region27: #{tpu_custom_call.1} parent=1 // pred_check_branch
      %70 = sbr.rel (0) target = $region29
    $region28: #{tpu_custom_call.1} parent=1 // pred_region
      _
    $region29: #{tpu_custom_call.1} parent=1 // pred_fallthru
      _
    // Predicated region
    $region30: #{tpu_custom_call.1} parent=1 // pred_check
      _
    $region31: #{tpu_custom_call.1} parent=1 // pred_check_branch
      %72 = sbr.rel (0) target = $region33
    $region32: #{tpu_custom_call.1} parent=1 // pred_region
      %s74 = ssub.s32 2048, 2048
      %75 = vsyncadd [#allocation9], %s74
      %s76 = sshll.u32 [#allocation10], 4
      %s77 = int_to_ptr.vmem [resolvable:$true] %s76
      %82 = dma.hbm_to_vmem [thread:$0]  %s7, 2048, %s77, [#allocation9], 128, 128, 8
    $region33: #{tpu_custom_call.1} parent=1 // pred_fallthru
      _
    // Predicated region
    $region34: #{tpu_custom_call.1} parent=1 // pred_check
      _
    $region35: #{tpu_custom_call.1} parent=1 // pred_check_branch
      %84 = sbr.rel (0) target = $region37
    $region36: #{tpu_custom_call.1} parent=1 // pred_region
      _
    $region37: #{tpu_custom_call.1} parent=1 // pred_fallthru
      _
    // Predicated region
    $region38: #{tpu_custom_call.1} parent=1 // pred_check
      _
    $region39: #{tpu_custom_call.1} parent=1 // pred_check_branch
      %86 = sbr.rel (0) target = $region41
    $region40: #{tpu_custom_call.1} parent=1 // pred_region
      _
    $region41: #{tpu_custom_call.1} parent=1 // pred_fallthru
      _
    // Predicated region
    $region42: #{tpu_custom_call.1} parent=1 // pred_check
      _
    $region43: #{tpu_custom_call.1} parent=1 // pred_check_branch
      %88 = sbr.rel (0) target = $region45
    $region44: #{tpu_custom_call.1} parent=1 // pred_region
      _
    $region45: #{tpu_custom_call.1} parent=1 // pred_fallthru
      _
    // Predicated region
    $region46: #{tpu_custom_call.1} parent=1 // pred_check
      _
    $region47: #{tpu_custom_call.1} parent=1 // pred_check_branch
      %90 = sbr.rel (0) target = $region49
    $region48: #{tpu_custom_call.1} parent=1 // pred_region
      %91 = dma.done [#allocation4], 128
    $region49: #{tpu_custom_call.1} parent=1 // pred_fallthru
      _
    // Predicated region
    $region50: #{tpu_custom_call.1} parent=1 // pred_check
      _
    $region51: #{tpu_custom_call.1} parent=1 // pred_check_branch
      %93 = sbr.rel (0) target = $region53
    $region52: #{tpu_custom_call.1} parent=1 // pred_region
      %94 = dma.done [#allocation6], 128
    $region53: #{tpu_custom_call.1} parent=1 // pred_fallthru
      _
    // Predicated region
    $region54: #{tpu_custom_call.1} parent=1 // pred_check
      _
    $region55: #{tpu_custom_call.1} parent=1 // pred_check_branch
      %96 = sbr.rel (0) target = $region57
    $region56: #{tpu_custom_call.1} parent=1 // pred_region
      %97 = dma.done [#allocation6], 256
    $region57: #{tpu_custom_call.1} parent=1 // pred_fallthru
      _
    // Predicated region
    $region58: #{tpu_custom_call.1} parent=1 // pred_check
      _
    $region59: #{tpu_custom_call.1} parent=1 // pred_check_branch
      %99 = sbr.rel (0) target = $region61
    $region60: #{tpu_custom_call.1} parent=1 // pred_region
      %100 = dma.done [#allocation9], 2048
    $region61: #{tpu_custom_call.1} parent=1 // pred_fallthru
      _
    // Predicated region
    $region62: #{tpu_custom_call.1} parent=1 // pred_check
      _
    $region63: #{tpu_custom_call.1} parent=1 // pred_check_branch
      %102 = sbr.rel (0) target = $region65
    $region64: #{tpu_custom_call.1} parent=1 // pred_region
      %103 = dma.done [#allocation9], 2048
    $region65: #{tpu_custom_call.1} parent=1 // pred_fallthru
      _
    %v104 = vld [vmem:[#allocation3] sm:$0xff]
    %v105 = vld [vmem:[#allocation7] sm:$0xff]
    %v106 = vld [vmem:[#allocation7 + $0x8] sm:$0xff]
    %v107 = vld [vmem:[#allocation5] sm:$0xff]
    %v108 = vld [vmem:[%s3] sm:$0xff]
    %vm109 = vcmask 64512
    %v111 = vsel %vm109, %v107, 0
    %113 = vmatprep.subr.mxu0 0.0
    %114 = vmatpush1.msra.mxu0 %v108
    %115 = vmatprep.subr.mxu0 0.0
    %116 = vmatpush1.msra.mxu0 0.0
    %117 = vmatprep.subr.mxu0 0.0
    %118 = vmatpush1.msra.mxu0 0.0
    %119 = vmatprep.subr.mxu0 0.0
    %120 = vmatpush1.msra.mxu0 0.0
    %121 = vmatprep.subr.mxu0 0.0
    %122 = vmatpush1.msra.mxu0 0.0
    %123 = vmatprep.subr.mxu0 0.0
    %124 = vmatpush1.msra.mxu0 0.0
    %125 = vmatprep.subr.mxu0 0.0
    %126 = vmatpush1.msra.mxu0 0.0
    %127 = vmatprep.subr.mxu0 0.0
    %128 = vmatpush1.msra.mxu0 0.0
    %129 = vmatprep.subr.mxu0 0.0
    %130 = vmatpush1.msra.mxu0 0.0
    %131 = vmatprep.subr.mxu0 0.0
    %132 = vmatpush1.msra.mxu0 0.0
    %133 = vmatprep.subr.mxu0 0.0
    %134 = vmatpush1.msra.mxu0 0.0
    %135 = vmatprep.subr.mxu0 0.0
    %136 = vmatpush1.msra.mxu0 0.0
    %137 = vmatprep.subr.mxu0 0.0
    %138 = vmatpush1.msra.mxu0 0.0
    %139 = vmatprep.subr.mxu0 0.0
    %140 = vmatpush1.msra.mxu0 0.0
    %141 = vmatprep.subr.mxu0 0.0
    %142 = vmatpush1.msra.mxu0 0.0
    %143 = vmatprep.subr.mxu0 0.0
    %144 = vmatpush1.msra.mxu0 0.0
    %145 = vmatprep.subr.mxu0 0.0
    %146 = vmatpush1.msra.mxu0 0.0
    %147 = vmatprep.subr.mxu0 0.0
    %148 = vmatpush1.msra.mxu0 0.0
    %149 = vmatprep.subr.mxu0 0.0
    %150 = vmatpush1.msra.mxu0 0.0
    %151 = vmatprep.subr.mxu0 0.0
    %152 = vmatpush1.msra.mxu0 0.0
    %153 = vmatprep.subr.mxu0 0.0
    %154 = vmatpush1.msra.mxu0 0.0
    %155 = vmatprep.subr.mxu0 0.0
    %156 = vmatpush1.msra.mxu0 0.0
    %157 = vmatprep.subr.mxu0 0.0
    %158 = vmatpush1.msra.mxu0 0.0
    %159 = vmatprep.subr.mxu0 0.0
    %160 = vmatpush1.msra.mxu0 0.0
    %161 = vmatprep.subr.mxu0 0.0
    %162 = vmatpush1.msra.mxu0 0.0
    %163 = vmatprep.subr.mxu0 0.0
    %164 = vmatpush1.msra.mxu0 0.0
    %165 = vmatprep.subr.mxu0 0.0
    %166 = vmatpush1.msra.mxu0 0.0
    %167 = vmatprep.subr.mxu0 0.0
    %168 = vmatpush1.msra.mxu0 0.0
    %169 = vmatprep.subr.mxu0 0.0
    %170 = vmatpush1.msra.mxu0 0.0
    %171 = vmatprep.subr.mxu0 0.0
    %172 = vmatpush1.msra.mxu0 0.0
    %173 = vmatprep.subr.mxu0 0.0
    %174 = vmatpush1.msra.mxu0 0.0
    %175 = vmatprep.subr.mxu0 0.0
    %176 = vmatpush1.msra.mxu0 0.0
    %177 = vmatprep.mubr.f32.mxu0 0.0
    %178 = vmatmul.mubr.f32.gmra.mrb[0].mxu0 %v111
    %v179 = vpop.f32.mrb[0].mxu0
    %v180 = vadd.f32 0.0, %v179
    %v181 = vpop.f32.mrb[0].mxu0
    %182 = vdwg.mxu0
    %vm183 = vcmask 130048
    %v185 = vsel %vm183, %v104, 0
    %187 = vmatprep.subr.mxu0 0.0
    %188 = vmatpush1.msra.mxu0 %v105
    %189 = vmatprep.subr.mxu0 0.0
    %190 = vmatpush1.msra.mxu0 %v106
    %191 = vmatprep.subr.mxu0 0.0
    %192 = vmatpush1.msra.mxu0 0.0
    %193 = vmatprep.subr.mxu0 0.0
    %194 = vmatpush1.msra.mxu0 0.0
    %195 = vmatprep.subr.mxu0 0.0
    %196 = vmatpush1.msra.mxu0 0.0
    %197 = vmatprep.subr.mxu0 0.0
    %198 = vmatpush1.msra.mxu0 0.0
    %199 = vmatprep.subr.mxu0 0.0
    %200 = vmatpush1.msra.mxu0 0.0
    %201 = vmatprep.subr.mxu0 0.0
    %202 = vmatpush1.msra.mxu0 0.0
    %203 = vmatprep.subr.mxu0 0.0
    %204 = vmatpush1.msra.mxu0 0.0
    %205 = vmatprep.subr.mxu0 0.0
    %206 = vmatpush1.msra.mxu0 0.0
    %207 = vmatprep.subr.mxu0 0.0
    %208 = vmatpush1.msra.mxu0 0.0
    %209 = vmatprep.subr.mxu0 0.0
    %210 = vmatpush1.msra.mxu0 0.0
    %211 = vmatprep.subr.mxu0 0.0
    %212 = vmatpush1.msra.mxu0 0.0
    %213 = vmatprep.subr.mxu0 0.0
    %214 = vmatpush1.msra.mxu0 0.0
    %215 = vmatprep.subr.mxu0 0.0
    %216 = vmatpush1.msra.mxu0 0.0
    %217 = vmatprep.subr.mxu0 0.0
    %218 = vmatpush1.msra.mxu0 0.0
    %219 = vmatprep.subr.mxu0 0.0
    %220 = vmatpush1.msra.mxu0 0.0
    %221 = vmatprep.subr.mxu0 0.0
    %222 = vmatpush1.msra.mxu0 0.0
    %223 = vmatprep.subr.mxu0 0.0
    %224 = vmatpush1.msra.mxu0 0.0
    %225 = vmatprep.subr.mxu0 0.0
    %226 = vmatpush1.msra.mxu0 0.0
    %227 = vmatprep.subr.mxu0 0.0
    %228 = vmatpush1.msra.mxu0 0.0
    %229 = vmatprep.subr.mxu0 0.0
    %230 = vmatpush1.msra.mxu0 0.0
    %231 = vmatprep.subr.mxu0 0.0
    %232 = vmatpush1.msra.mxu0 0.0
    %233 = vmatprep.subr.mxu0 0.0
    %234 = vmatpush1.msra.mxu0 0.0
    %235 = vmatprep.subr.mxu0 0.0
    %236 = vmatpush1.msra.mxu0 0.0
    %237 = vmatprep.subr.mxu0 0.0
    %238 = vmatpush1.msra.mxu0 0.0
    %239 = vmatprep.subr.mxu0 0.0
    %240 = vmatpush1.msra.mxu0 0.0
    %241 = vmatprep.subr.mxu0 0.0
    %242 = vmatpush1.msra.mxu0 0.0
    %243 = vmatprep.subr.mxu0 0.0
    %244 = vmatpush1.msra.mxu0 0.0
    %245 = vmatprep.subr.mxu0 0.0
    %246 = vmatpush1.msra.mxu0 0.0
    %247 = vmatprep.subr.mxu0 0.0
    %248 = vmatpush1.msra.mxu0 0.0
    %249 = vmatprep.subr.mxu0 0.0
    %250 = vmatpush1.msra.mxu0 0.0
    %251 = vmatprep.mubr.f32.mxu0 0.0
    %252 = vmatmul.mubr.f32.gmra.mrb[0].mxu0 %v185
    %v253 = vpop.f32.mrb[0].mxu0
    %v254 = vadd.f32 %v180, %v253
    %v255 = vpop.f32.mrb[0].mxu0
    %256 = vdwg.mxu0
    %v257 = vld [vmem:[%s4] sm:$0x1]
    %v259 = vlaneseq
    %v260 = vshrl.u32 %v259, 7
    %v261 = vsub.s32 0, %v260
    %v262 = vrot.slane %v257, %v261
    %v264 = vadd.f32 %v254, %v262
    %v265 = vld [vmem:[#allocation8] sm:$0xff]
    %v266 = vld [vmem:[#allocation8 + $0x8] sm:$0xff]
    %v267 = vld [vmem:[#allocation8 + $0x10] sm:$0xff]
    %v268 = vld [vmem:[#allocation8 + $0x18] sm:$0xff]
    %v269 = vld [vmem:[#allocation8 + $0x20] sm:$0xff]
    %v270 = vld [vmem:[#allocation8 + $0x28] sm:$0xff]
    %v271 = vld [vmem:[#allocation8 + $0x30] sm:$0xff]
    %v272 = vld [vmem:[#allocation8 + $0x38] sm:$0xff]
    %v273 = vld [vmem:[#allocation8 + $0x40] sm:$0xff]
    %v274 = vld [vmem:[#allocation8 + $0x48] sm:$0xff]
    %v275 = vld [vmem:[#allocation8 + $0x50] sm:$0xff]
    %v276 = vld [vmem:[#allocation8 + $0x58] sm:$0xff]
    %v277 = vld [vmem:[#allocation8 + $0x60] sm:$0xff]
    %v278 = vld [vmem:[#allocation8 + $0x68] sm:$0xff]
    %v279 = vld [vmem:[#allocation8 + $0x70] sm:$0xff]
    %v280 = vld [vmem:[#allocation8 + $0x78] sm:$0xff]
    %v281 = vld [vmem:[%s6] sm:$0x1]
    %v283 = vlaneseq
    %v284 = vshrl.u32 %v283, 7
    %v285 = vsub.s32 0, %v284
    %v286 = vrot.slane %v281, %v285
    %288 = vmatprep.subr.mxu0 0.0
    %289 = vmatpush1.msra.mxu0 %v265
    %290 = vmatprep.subr.mxu0 0.0
    %291 = vmatpush1.msra.mxu0 %v266
    %292 = vmatprep.subr.mxu0 0.0
    %293 = vmatpush1.msra.mxu0 %v267
    %294 = vmatprep.subr.mxu0 0.0
    %295 = vmatpush1.msra.mxu0 %v268
    %296 = vmatprep.subr.mxu0 0.0
    %297 = vmatpush1.msra.mxu0 %v269
    %298 = vmatprep.subr.mxu0 0.0
    %299 = vmatpush1.msra.mxu0 %v270
    %300 = vmatprep.subr.mxu0 0.0
    %301 = vmatpush1.msra.mxu0 %v271
    %302 = vmatprep.subr.mxu0 0.0
    %303 = vmatpush1.msra.mxu0 %v272
    %304 = vmatprep.subr.mxu0 0.0
    %305 = vmatpush1.msra.mxu0 %v273
    %306 = vmatprep.subr.mxu0 0.0
    %307 = vmatpush1.msra.mxu0 %v274
    %308 = vmatprep.subr.mxu0 0.0
    %309 = vmatpush1.msra.mxu0 %v275
    %310 = vmatprep.subr.mxu0 0.0
    %311 = vmatpush1.msra.mxu0 %v276
    %312 = vmatprep.subr.mxu0 0.0
    %313 = vmatpush1.msra.mxu0 %v277
    %314 = vmatprep.subr.mxu0 0.0
    %315 = vmatpush1.msra.mxu0 %v278
    %316 = vmatprep.subr.mxu0 0.0
    %317 = vmatpush1.msra.mxu0 %v279
    %318 = vmatprep.subr.mxu0 0.0
    %319 = vmatpush1.msra.mxu0 %v280
    %320 = vmatprep.subr.mxu0 0.0
    %321 = vmatpush1.msra.mxu0 0.0
    %322 = vmatprep.subr.mxu0 0.0
    %323 = vmatpush1.msra.mxu0 0.0
    %324 = vmatprep.subr.mxu0 0.0
    %325 = vmatpush1.msra.mxu0 0.0
    %326 = vmatprep.subr.mxu0 0.0
    %327 = vmatpush1.msra.mxu0 0.0
    %328 = vmatprep.subr.mxu0 0.0
    %329 = vmatpush1.msra.mxu0 0.0
    %330 = vmatprep.subr.mxu0 0.0
    %331 = vmatpush1.msra.mxu0 0.0
    %332 = vmatprep.subr.mxu0 0.0
    %333 = vmatpush1.msra.mxu0 0.0
    %334 = vmatprep.subr.mxu0 0.0
    %335 = vmatpush1.msra.mxu0 0.0
    %336 = vmatprep.subr.mxu0 0.0
    %337 = vmatpush1.msra.mxu0 0.0
    %338 = vmatprep.subr.mxu0 0.0
    %339 = vmatpush1.msra.mxu0 0.0
    %340 = vmatprep.subr.mxu0 0.0
    %341 = vmatpush1.msra.mxu0 0.0
    %342 = vmatprep.subr.mxu0 0.0
    %343 = vmatpush1.msra.mxu0 0.0
    %344 = vmatprep.subr.mxu0 0.0
    %345 = vmatpush1.msra.mxu0 0.0
    %346 = vmatprep.subr.mxu0 0.0
    %347 = vmatpush1.msra.mxu0 0.0
    %348 = vmatprep.subr.mxu0 0.0
    %349 = vmatpush1.msra.mxu0 0.0
    %350 = vmatprep.subr.mxu0 0.0
    %351 = vmatpush1.msra.mxu0 0.0
    %352 = vmatprep.mubr.f32.mxu0 0.0
    %353 = vmatmul.mubr.f32.gmra.mrb[0].mxu0 %v264
    %v354 = vpop.f32.mrb[0].mxu0
    %v355 = vadd.f32 %v286, %v354
    %v356 = vpop.f32.mrb[0].mxu0
    %357 = vdwg.mxu0
    %v358 = vmax.f32 %v355, 0.0
    %v359 = vld [vmem:[#allocation10] sm:$0xff]
    %v360 = vld [vmem:[#allocation10 + $0x8] sm:$0xff]
    %v361 = vld [vmem:[#allocation10 + $0x10] sm:$0xff]
    %v362 = vld [vmem:[#allocation10 + $0x18] sm:$0xff]
    %v363 = vld [vmem:[#allocation10 + $0x20] sm:$0xff]
    %v364 = vld [vmem:[#allocation10 + $0x28] sm:$0xff]
    %v365 = vld [vmem:[#allocation10 + $0x30] sm:$0xff]
    %v366 = vld [vmem:[#allocation10 + $0x38] sm:$0xff]
    %v367 = vld [vmem:[#allocation10 + $0x40] sm:$0xff]
    %v368 = vld [vmem:[#allocation10 + $0x48] sm:$0xff]
    %v369 = vld [vmem:[#allocation10 + $0x50] sm:$0xff]
    %v370 = vld [vmem:[#allocation10 + $0x58] sm:$0xff]
    %v371 = vld [vmem:[#allocation10 + $0x60] sm:$0xff]
    %v372 = vld [vmem:[#allocation10 + $0x68] sm:$0xff]
    %v373 = vld [vmem:[#allocation10 + $0x70] sm:$0xff]
    %v374 = vld [vmem:[#allocation10 + $0x78] sm:$0xff]
    %v375 = vld [vmem:[%s8] sm:$0x1]
    %v377 = vlaneseq
    %v378 = vshrl.u32 %v377, 7
    %v379 = vsub.s32 0, %v378
    %v380 = vrot.slane %v375, %v379
    %382 = vmatprep.subr.mxu0 0.0
    %383 = vmatpush1.msra.mxu0 %v359
    %384 = vmatprep.subr.mxu0 0.0
    %385 = vmatpush1.msra.mxu0 %v360
    %386 = vmatprep.subr.mxu0 0.0
    %387 = vmatpush1.msra.mxu0 %v361
    %388 = vmatprep.subr.mxu0 0.0
    %389 = vmatpush1.msra.mxu0 %v362
    %390 = vmatprep.subr.mxu0 0.0
    %391 = vmatpush1.msra.mxu0 %v363
    %392 = vmatprep.subr.mxu0 0.0
    %393 = vmatpush1.msra.mxu0 %v364
    %394 = vmatprep.subr.mxu0 0.0
    %395 = vmatpush1.msra.mxu0 %v365
    %396 = vmatprep.subr.mxu0 0.0
    %397 = vmatpush1.msra.mxu0 %v366
    %398 = vmatprep.subr.mxu0 0.0
    %399 = vmatpush1.msra.mxu0 %v367
    %400 = vmatprep.subr.mxu0 0.0
    %401 = vmatpush1.msra.mxu0 %v368
    %402 = vmatprep.subr.mxu0 0.0
    %403 = vmatpush1.msra.mxu0 %v369
    %404 = vmatprep.subr.mxu0 0.0
    %405 = vmatpush1.msra.mxu0 %v370
    %406 = vmatprep.subr.mxu0 0.0
    %407 = vmatpush1.msra.mxu0 %v371
    %408 = vmatprep.subr.mxu0 0.0
    %409 = vmatpush1.msra.mxu0 %v372
    %410 = vmatprep.subr.mxu0 0.0
    %411 = vmatpush1.msra.mxu0 %v373
    %412 = vmatprep.subr.mxu0 0.0
    %413 = vmatpush1.msra.mxu0 %v374
    %414 = vmatprep.subr.mxu0 0.0
    %415 = vmatpush1.msra.mxu0 0.0
    %416 = vmatprep.subr.mxu0 0.0
    %417 = vmatpush1.msra.mxu0 0.0
    %418 = vmatprep.subr.mxu0 0.0
    %419 = vmatpush1.msra.mxu0 0.0
    %420 = vmatprep.subr.mxu0 0.0
    %421 = vmatpush1.msra.mxu0 0.0
    %422 = vmatprep.subr.mxu0 0.0
    %423 = vmatpush1.msra.mxu0 0.0
    %424 = vmatprep.subr.mxu0 0.0
    %425 = vmatpush1.msra.mxu0 0.0
    %426 = vmatprep.subr.mxu0 0.0
    %427 = vmatpush1.msra.mxu0 0.0
    %428 = vmatprep.subr.mxu0 0.0
    %429 = vmatpush1.msra.mxu0 0.0
    %430 = vmatprep.subr.mxu0 0.0
    %431 = vmatpush1.msra.mxu0 0.0
    %432 = vmatprep.subr.mxu0 0.0
    %433 = vmatpush1.msra.mxu0 0.0
    %434 = vmatprep.subr.mxu0 0.0
    %435 = vmatpush1.msra.mxu0 0.0
    %436 = vmatprep.subr.mxu0 0.0
    %437 = vmatpush1.msra.mxu0 0.0
    %438 = vmatprep.subr.mxu0 0.0
    %439 = vmatpush1.msra.mxu0 0.0
    %440 = vmatprep.subr.mxu0 0.0
    %441 = vmatpush1.msra.mxu0 0.0
    %442 = vmatprep.subr.mxu0 0.0
    %443 = vmatpush1.msra.mxu0 0.0
    %444 = vmatprep.subr.mxu0 0.0
    %445 = vmatpush1.msra.mxu0 0.0
    %446 = vmatprep.mubr.f32.mxu0 0.0
    %447 = vmatmul.mubr.f32.gmra.mrb[0].mxu0 %v358
    %v448 = vpop.f32.mrb[0].mxu0
    %v449 = vadd.f32 %v380, %v448
    %v450 = vpop.f32.mrb[0].mxu0
    %451 = vdwg.mxu0
    %v452 = vmax.f32 %v449, 0.0
    %v453 = vld [vmem:[%s9] sm:$0x1]
    %v455 = vlaneseq
    %v456 = vshrl.u32 %v455, 7
    %v457 = vsub.s32 0, %v456
    %v458 = vrot.slane %v453, %v457
    %v460 = vmul.f32 %v452, %v458
    %461 = vadd.xlane.f32.xlu0 %v460
    %v462 = vpop.xlane.xlu0 %461
    %v463 = vld [vmem:[#allocation2] sm:$0x1]
    %v465 = vlaneseq
    %v466 = vshrl.u32 %v465, 7
    %v467 = vsub.s32 0, %v466
    %v468 = vrot.slane %v463, %v467
    %v470 = vadd.f32 %v462, %v468
    %vm471 = vcmask 7168
    %472 = vst.msk [vmem:[%s11] sm:$0xff] %vm471, %v470
    // Predicated region
    $region66: #{tpu_custom_call.1} parent=1 // pred_check
      _
    $region67: #{tpu_custom_call.1} parent=1 // pred_check_branch
      %474 = sbr.rel (0) target = $region69
    $region68: #{tpu_custom_call.1} parent=1 // pred_region
      _
    $region69: #{tpu_custom_call.1} parent=1 // pred_fallthru
      _
    // Predicated region
    $region70: #{tpu_custom_call.1} parent=1 // pred_check
      _
    $region71: #{tpu_custom_call.1} parent=1 // pred_check_branch
      %476 = sbr.rel (0) target = $region73
    $region72: #{tpu_custom_call.1} parent=1 // pred_region
      _
    $region73: #{tpu_custom_call.1} parent=1 // pred_fallthru
      _
    %477 = vsyncpa [#allocation4], 1
    %478 = vsyncpa [#allocation6], 1
    %479 = vsyncpa [#allocation9], 1

</llo_original>
